<compile_context>
chip_gen: v5e
topology: v5e:2x2
jax: 0.10.0
libtpu: 0.0.40
codegen_flags: <defaults>
</compile_context>

<pallas_src>
import functools

import jax
import jax.numpy as jnp
from jax.experimental import pallas as pl
from jax.experimental.pallas import tpu as pltpu

F_DIM = 100          # logical feature width (PyTorch module)
F_PAD = 128          # lane-padded feature width used inside the kernel
EPS = 1e-5


def generator_kernel(x_ref, w_ref, v_ref, o_ref):
    # x_ref: (B, 128) f32   w_ref: (4, 128, 128) bf16   v_ref: (10, 128) f32
    h = x_ref[...]                          # already f32; no redundant cast
    inv_b = 1.0 / x_ref.shape[0]            # static at trace time

    for layer in range(4):                  # unrolled at trace time
        wt = w_ref[layer]                   # (128, 128) bf16  (W^T)
        bias = v_ref[layer:layer + 1, :]    # (1, 128) f32
        h = jnp.dot(h.astype(jnp.bfloat16), wt,
                    preferred_element_type=jnp.float32) + bias

        if layer < 3:
            gamma = v_ref[4 + layer:5 + layer, :]   # (1, 128)
            beta = v_ref[7 + layer:8 + layer, :]    # (1, 128)

            # One-pass batch statistics (biased variance, training-mode BN).
            s = jnp.sum(h, axis=0, keepdims=True)
            sq = jnp.sum(h * h, axis=0, keepdims=True)
            mean = s * inv_b
            var = jnp.maximum(sq * inv_b - mean * mean, 0.0)

            # Fold normalize + affine into one scale/shift row, then a single
            # fused multiply-add + ReLU over the (B, 128) activation.
            scale = jax.lax.rsqrt(var + EPS) * gamma     # (1, 128)
            shift = beta - mean * scale                  # (1, 128)
            h = jnp.maximum(h * scale + shift, 0.0)

    o_ref[...] = h                          # lane-dense (B, 128) f32 store


@jax.jit
def generator_forward(x, w_stack, vec_stack):
    """x: [B, 100] f32; returns [B, 100] f32."""
    B = x.shape[0]
    x_pad = jnp.pad(x, ((0, 0), (0, F_PAD - F_DIM)))

    vmem = pl.BlockSpec(memory_space=pltpu.MemorySpace.VMEM)
    out_pad = pl.pallas_call(
        generator_kernel,
        out_shape=jax.ShapeDtypeStruct((B, F_PAD), jnp.float32),
        in_specs=[vmem, vmem, vmem],
        out_specs=vmem,
        compiler_params=pltpu.CompilerParams(
            # Safe on every generation (v7x physical VMEM is 64 MiB); gives
            # headroom above the 16/32 MiB default scoped limit for larger B.
            vmem_limit_bytes=48 * 1024 * 1024,
        ),
    )(x_pad, w_stack, vec_stack)
    # TODO(synk): for very large B, add a batch grid with two-pass BN instead
    # of keeping the whole batch resident in VMEM.
    return out_pad[:, :F_DIM]


def init_params(key):
    """Synthetic init mimicking PyTorch Linear defaults, packed + padded.

    Returns:
      w_stack:   (4, 128, 128) bf16 -- layer l holds W_l^T, zero-padded.
      vec_stack: (10, 128) f32      -- rows 0..3 bias, 4..6 gamma(=1), 7..9 beta(=0);
                                       pad lanes (100..127) are zero everywhere.
    """
    bound = 1.0 / float(jnp.sqrt(jnp.float32(F_DIM)))
    keys = jax.random.split(key, 8)
    w_stack = jnp.zeros((4, F_PAD, F_PAD), jnp.float32)
    vec_stack = jnp.zeros((10, F_PAD), jnp.float32)
    ki = 0
    for layer in range(4):
        w = jax.random.uniform(keys[ki], (F_DIM, F_DIM), jnp.float32, -bound, bound)
        ki += 1
        b = jax.random.uniform(keys[ki], (F_DIM,), jnp.float32, -bound, bound)
        ki += 1
        w_stack = w_stack.at[layer, :F_DIM, :F_DIM].set(w.T)
        vec_stack = vec_stack.at[layer, :F_DIM].set(b)
        if layer < 3:
            vec_stack = vec_stack.at[4 + layer, :F_DIM].set(1.0)  # gamma
            # beta rows (7..9) remain zero
    return w_stack.astype(jnp.bfloat16), vec_stack


def generator_reference(x, w_stack, vec_stack):
    """Pure-JAX reference mirroring the kernel math (bf16 matmul, f32 BN)."""
    B = x.shape[0]
    h = jnp.pad(x, ((0, 0), (0, F_PAD - F_DIM)))
    for layer in range(4):
        h = jnp.dot(h.astype(jnp.bfloat16), w_stack[layer],
                    preferred_element_type=jnp.float32) + vec_stack[layer]
        if layer < 3:
            mean = jnp.mean(h, axis=0, keepdims=True)
            var = jnp.mean((h - mean) ** 2, axis=0, keepdims=True)
            gamma = vec_stack[4 + layer]
            beta = vec_stack[7 + layer]
            h = jnp.maximum(
                (h - mean) * jax.lax.rsqrt(var + EPS) * gamma + beta, 0.0)
    return h[:, :F_DIM]


if __name__ == "__main__":
    key = jax.random.PRNGKey(0)
    k_x, k_p = jax.random.split(key)

    B = 64  # BatchNorm1d (training mode) needs batch > 1; multiple of 8 sublanes
    x = jax.random.normal(k_x, (B, F_DIM), jnp.float32)
    w_stack, vec_stack = init_params(k_p)

    out = generator_forward(x, w_stack, vec_stack)
    out = jax.block_until_ready(out)

    ref = generator_reference(x, w_stack, vec_stack)
    assert out.shape == (B, F_DIM)
    assert jnp.allclose(out, ref, atol=5e-3, rtol=5e-3), "mismatch vs reference"

    print("KERNEL_OK")
</pallas_src>

<mosaic_0001>
module attributes {stable_mosaic.version = 11 : i64} {
  func.func @generator_kernel(%arg0: memref<64x128xf32, #tpu.memory_space<vmem>>, %arg1: memref<4x128x128xbf16, #tpu.memory_space<vmem>>, %arg2: memref<10x128xf32, #tpu.memory_space<vmem>>, %arg3: memref<64x128xf32, #tpu.memory_space<vmem>>) attributes {dimension_semantics = [], scalar_prefetch = 0 : i64, scratch_operands = 0 : i64, tpu.core_type = #tpu.core_type<tc>} {
    %c0 = arith.constant 0 : index
    %c0_0 = arith.constant 0 : index
    %0 = vector.load %arg0[%c0, %c0_0] : memref<64x128xf32, #tpu.memory_space<vmem>>, vector<64x128xf32>
    %c0_1 = arith.constant 0 : index
    %c0_2 = arith.constant 0 : index
    %c0_3 = arith.constant 0 : index
    %1 = vector.load %arg1[%c0_1, %c0_2, %c0_3] : memref<4x128x128xbf16, #tpu.memory_space<vmem>>, vector<1x128x128xbf16>
    %2 = vector.shape_cast %1 : vector<1x128x128xbf16> to vector<128x128xbf16>
    %c0_4 = arith.constant 0 : index
    %c0_5 = arith.constant 0 : index
    %3 = vector.load %arg2[%c0_4, %c0_5] : memref<10x128xf32, #tpu.memory_space<vmem>>, vector<1x128xf32>
    %4 = arith.truncf %0 : vector<64x128xf32> to vector<64x128xbf16>
    %cst = arith.constant dense<0.000000e+00> : vector<64x128xf32>
    %5 = tpu.matmul %4, %2, %cst {dimension_numbers = #tpu.dot_dimension_numbers<[1], [0], [0], [1], [0, 0, 1, 1], [], []>} : vector<64x128xbf16>, vector<128x128xbf16>, vector<64x128xf32> -> vector<64x128xf32>
    %6 = vector.broadcast %3 : vector<1x128xf32> to vector<64x128xf32>
    %7 = arith.addf %5, %6 : vector<64x128xf32>
    %c4 = arith.constant 4 : index
    %c0_6 = arith.constant 0 : index
    %8 = vector.load %arg2[%c4, %c0_6] : memref<10x128xf32, #tpu.memory_space<vmem>>, vector<1x128xf32>
    %c7 = arith.constant 7 : index
    %c0_7 = arith.constant 0 : index
    %9 = vector.load %arg2[%c7, %c0_7] : memref<10x128xf32, #tpu.memory_space<vmem>>, vector<1x128xf32>
    %cst_8 = arith.constant dense<0.000000e+00> : vector<128xf32>
    %10 = vector.multi_reduction <add>, %7, %cst_8 [0] : vector<64x128xf32> to vector<128xf32>
    %11 = vector.shape_cast %10 : vector<128xf32> to vector<1x128xf32>
    %12 = arith.mulf %7, %7 : vector<64x128xf32>
    %cst_9 = arith.constant dense<0.000000e+00> : vector<128xf32>
    %13 = vector.multi_reduction <add>, %12, %cst_9 [0] : vector<64x128xf32> to vector<128xf32>
    %14 = vector.shape_cast %13 : vector<128xf32> to vector<1x128xf32>
    %cst_10 = arith.constant 1.562500e-02 : f32
    %15 = vector.broadcast %cst_10 : f32 to vector<1x128xf32>
    %16 = arith.mulf %11, %15 : vector<1x128xf32>
    %cst_11 = arith.constant 1.562500e-02 : f32
    %17 = vector.broadcast %cst_11 : f32 to vector<1x128xf32>
    %18 = arith.mulf %14, %17 : vector<1x128xf32>
    %19 = arith.mulf %16, %16 : vector<1x128xf32>
    %20 = arith.subf %18, %19 : vector<1x128xf32>
    %cst_12 = arith.constant 0.000000e+00 : f32
    %21 = vector.broadcast %cst_12 : f32 to vector<1x128xf32>
    %22 = arith.maximumf %20, %21 : vector<1x128xf32>
    %cst_13 = arith.constant 9.99999974E-6 : f32
    %23 = vector.broadcast %cst_13 : f32 to vector<1x128xf32>
    %24 = arith.addf %22, %23 : vector<1x128xf32>
    %25 = math.rsqrt %24 : vector<1x128xf32>
    %26 = arith.mulf %25, %8 : vector<1x128xf32>
    %27 = arith.mulf %16, %26 : vector<1x128xf32>
    %28 = arith.subf %9, %27 : vector<1x128xf32>
    %29 = vector.broadcast %26 : vector<1x128xf32> to vector<64x128xf32>
    %30 = arith.mulf %7, %29 : vector<64x128xf32>
    %31 = vector.broadcast %28 : vector<1x128xf32> to vector<64x128xf32>
    %32 = arith.addf %30, %31 : vector<64x128xf32>
    %cst_14 = arith.constant 0.000000e+00 : f32
    %33 = vector.broadcast %cst_14 : f32 to vector<64x128xf32>
    %34 = arith.maximumf %32, %33 : vector<64x128xf32>
    %c1 = arith.constant 1 : index
    %c0_15 = arith.constant 0 : index
    %c0_16 = arith.constant 0 : index
    %35 = vector.load %arg1[%c1, %c0_15, %c0_16] : memref<4x128x128xbf16, #tpu.memory_space<vmem>>, vector<1x128x128xbf16>
    %36 = vector.shape_cast %35 : vector<1x128x128xbf16> to vector<128x128xbf16>
    %c1_17 = arith.constant 1 : index
    %c0_18 = arith.constant 0 : index
    %37 = vector.load %arg2[%c1_17, %c0_18] : memref<10x128xf32, #tpu.memory_space<vmem>>, vector<1x128xf32>
    %38 = arith.truncf %34 : vector<64x128xf32> to vector<64x128xbf16>
    %cst_19 = arith.constant dense<0.000000e+00> : vector<64x128xf32>
    %39 = tpu.matmul %38, %36, %cst_19 {dimension_numbers = #tpu.dot_dimension_numbers<[1], [0], [0], [1], [0, 0, 1, 1], [], []>} : vector<64x128xbf16>, vector<128x128xbf16>, vector<64x128xf32> -> vector<64x128xf32>
    %40 = vector.broadcast %37 : vector<1x128xf32> to vector<64x128xf32>
    %41 = arith.addf %39, %40 : vector<64x128xf32>
    %c5 = arith.constant 5 : index
    %c0_20 = arith.constant 0 : index
    %42 = vector.load %arg2[%c5, %c0_20] : memref<10x128xf32, #tpu.memory_space<vmem>>, vector<1x128xf32>
    %c8 = arith.constant 8 : index
    %c0_21 = arith.constant 0 : index
    %43 = vector.load %arg2[%c8, %c0_21] : memref<10x128xf32, #tpu.memory_space<vmem>>, vector<1x128xf32>
    %cst_22 = arith.constant dense<0.000000e+00> : vector<128xf32>
    %44 = vector.multi_reduction <add>, %41, %cst_22 [0] : vector<64x128xf32> to vector<128xf32>
    %45 = vector.shape_cast %44 : vector<128xf32> to vector<1x128xf32>
    %46 = arith.mulf %41, %41 : vector<64x128xf32>
    %cst_23 = arith.constant dense<0.000000e+00> : vector<128xf32>
    %47 = vector.multi_reduction <add>, %46, %cst_23 [0] : vector<64x128xf32> to vector<128xf32>
    %48 = vector.shape_cast %47 : vector<128xf32> to vector<1x128xf32>
    %cst_24 = arith.constant 1.562500e-02 : f32
    %49 = vector.broadcast %cst_24 : f32 to vector<1x128xf32>
    %50 = arith.mulf %45, %49 : vector<1x128xf32>
    %cst_25 = arith.constant 1.562500e-02 : f32
    %51 = vector.broadcast %cst_25 : f32 to vector<1x128xf32>
    %52 = arith.mulf %48, %51 : vector<1x128xf32>
    %53 = arith.mulf %50, %50 : vector<1x128xf32>
    %54 = arith.subf %52, %53 : vector<1x128xf32>
    %cst_26 = arith.constant 0.000000e+00 : f32
    %55 = vector.broadcast %cst_26 : f32 to vector<1x128xf32>
    %56 = arith.maximumf %54, %55 : vector<1x128xf32>
    %cst_27 = arith.constant 9.99999974E-6 : f32
    %57 = vector.broadcast %cst_27 : f32 to vector<1x128xf32>
    %58 = arith.addf %56, %57 : vector<1x128xf32>
    %59 = math.rsqrt %58 : vector<1x128xf32>
    %60 = arith.mulf %59, %42 : vector<1x128xf32>
    %61 = arith.mulf %50, %60 : vector<1x128xf32>
    %62 = arith.subf %43, %61 : vector<1x128xf32>
    %63 = vector.broadcast %60 : vector<1x128xf32> to vector<64x128xf32>
    %64 = arith.mulf %41, %63 : vector<64x128xf32>
    %65 = vector.broadcast %62 : vector<1x128xf32> to vector<64x128xf32>
    %66 = arith.addf %64, %65 : vector<64x128xf32>
    %cst_28 = arith.constant 0.000000e+00 : f32
    %67 = vector.broadcast %cst_28 : f32 to vector<64x128xf32>
    %68 = arith.maximumf %66, %67 : vector<64x128xf32>
    %c2 = arith.constant 2 : index
    %c0_29 = arith.constant 0 : index
    %c0_30 = arith.constant 0 : index
    %69 = vector.load %arg1[%c2, %c0_29, %c0_30] : memref<4x128x128xbf16, #tpu.memory_space<vmem>>, vector<1x128x128xbf16>
    %70 = vector.shape_cast %69 : vector<1x128x128xbf16> to vector<128x128xbf16>
    %c2_31 = arith.constant 2 : index
    %c0_32 = arith.constant 0 : index
    %71 = vector.load %arg2[%c2_31, %c0_32] : memref<10x128xf32, #tpu.memory_space<vmem>>, vector<1x128xf32>
    %72 = arith.truncf %68 : vector<64x128xf32> to vector<64x128xbf16>
    %cst_33 = arith.constant dense<0.000000e+00> : vector<64x128xf32>
    %73 = tpu.matmul %72, %70, %cst_33 {dimension_numbers = #tpu.dot_dimension_numbers<[1], [0], [0], [1], [0, 0, 1, 1], [], []>} : vector<64x128xbf16>, vector<128x128xbf16>, vector<64x128xf32> -> vector<64x128xf32>
    %74 = vector.broadcast %71 : vector<1x128xf32> to vector<64x128xf32>
    %75 = arith.addf %73, %74 : vector<64x128xf32>
    %c6 = arith.constant 6 : index
    %c0_34 = arith.constant 0 : index
    %76 = vector.load %arg2[%c6, %c0_34] : memref<10x128xf32, #tpu.memory_space<vmem>>, vector<1x128xf32>
    %c9 = arith.constant 9 : index
    %c0_35 = arith.constant 0 : index
    %77 = vector.load %arg2[%c9, %c0_35] : memref<10x128xf32, #tpu.memory_space<vmem>>, vector<1x128xf32>
    %cst_36 = arith.constant dense<0.000000e+00> : vector<128xf32>
    %78 = vector.multi_reduction <add>, %75, %cst_36 [0] : vector<64x128xf32> to vector<128xf32>
    %79 = vector.shape_cast %78 : vector<128xf32> to vector<1x128xf32>
    %80 = arith.mulf %75, %75 : vector<64x128xf32>
    %cst_37 = arith.constant dense<0.000000e+00> : vector<128xf32>
    %81 = vector.multi_reduction <add>, %80, %cst_37 [0] : vector<64x128xf32> to vector<128xf32>
    %82 = vector.shape_cast %81 : vector<128xf32> to vector<1x128xf32>
    %cst_38 = arith.constant 1.562500e-02 : f32
    %83 = vector.broadcast %cst_38 : f32 to vector<1x128xf32>
    %84 = arith.mulf %79, %83 : vector<1x128xf32>
    %cst_39 = arith.constant 1.562500e-02 : f32
    %85 = vector.broadcast %cst_39 : f32 to vector<1x128xf32>
    %86 = arith.mulf %82, %85 : vector<1x128xf32>
    %87 = arith.mulf %84, %84 : vector<1x128xf32>
    %88 = arith.subf %86, %87 : vector<1x128xf32>
    %cst_40 = arith.constant 0.000000e+00 : f32
    %89 = vector.broadcast %cst_40 : f32 to vector<1x128xf32>
    %90 = arith.maximumf %88, %89 : vector<1x128xf32>
    %cst_41 = arith.constant 9.99999974E-6 : f32
    %91 = vector.broadcast %cst_41 : f32 to vector<1x128xf32>
    %92 = arith.addf %90, %91 : vector<1x128xf32>
    %93 = math.rsqrt %92 : vector<1x128xf32>
    %94 = arith.mulf %93, %76 : vector<1x128xf32>
    %95 = arith.mulf %84, %94 : vector<1x128xf32>
    %96 = arith.subf %77, %95 : vector<1x128xf32>
    %97 = vector.broadcast %94 : vector<1x128xf32> to vector<64x128xf32>
    %98 = arith.mulf %75, %97 : vector<64x128xf32>
    %99 = vector.broadcast %96 : vector<1x128xf32> to vector<64x128xf32>
    %100 = arith.addf %98, %99 : vector<64x128xf32>
    %cst_42 = arith.constant 0.000000e+00 : f32
    %101 = vector.broadcast %cst_42 : f32 to vector<64x128xf32>
    %102 = arith.maximumf %100, %101 : vector<64x128xf32>
    %c3 = arith.constant 3 : index
    %c0_43 = arith.constant 0 : index
    %c0_44 = arith.constant 0 : index
    %103 = vector.load %arg1[%c3, %c0_43, %c0_44] : memref<4x128x128xbf16, #tpu.memory_space<vmem>>, vector<1x128x128xbf16>
    %104 = vector.shape_cast %103 : vector<1x128x128xbf16> to vector<128x128xbf16>
    %c3_45 = arith.constant 3 : index
    %c0_46 = arith.constant 0 : index
    %105 = vector.load %arg2[%c3_45, %c0_46] : memref<10x128xf32, #tpu.memory_space<vmem>>, vector<1x128xf32>
    %106 = arith.truncf %102 : vector<64x128xf32> to vector<64x128xbf16>
    %cst_47 = arith.constant dense<0.000000e+00> : vector<64x128xf32>
    %107 = tpu.matmul %106, %104, %cst_47 {dimension_numbers = #tpu.dot_dimension_numbers<[1], [0], [0], [1], [0, 0, 1, 1], [], []>} : vector<64x128xbf16>, vector<128x128xbf16>, vector<64x128xf32> -> vector<64x128xf32>
    %108 = vector.broadcast %105 : vector<1x128xf32> to vector<64x128xf32>
    %109 = arith.addf %107, %108 : vector<64x128xf32>
    %c0_48 = arith.constant 0 : index
    %c0_49 = arith.constant 0 : index
    %110 = vector.load %arg3[%c0_48, %c0_49] : memref<64x128xf32, #tpu.memory_space<vmem>>, vector<64x128xf32>
    tpu.vector_store %arg3[%c0_48, %c0_49], %109 {strides = array<i32>} : memref<64x128xf32, #tpu.memory_space<vmem>>, vector<64x128xf32>,
    return
  }
}

</mosaic_0001>

<llo_original>
// kernel: generator_forward.1
$region0: #{generator_forward.1}
  #allocation0 [shape = 'u32[]', space=smem, size = 0x4, offset = 0x4, fixed_abs, tag = 'smem constant byte address 0x4 - core index']
  #allocation1 [shape = 'u32[72,128]{1,0:T(1,128)}', space=vmem, size = 0x9000, scoped, tag = 'internal scratch']
  %s0 = inlined_call_operand.vmem [shape: f32[64,128], index: 0, kind: input, shape index: {}]
  %s1 = inlined_call_operand.hbm [shape: bf16[4,128,128], index: 1, kind: input, shape index: {}]
  %s2 = inlined_call_operand.vmem [shape: f32[10,128], index: 2, kind: input, shape index: {}]
  %s3 = inlined_call_operand.hbm [shape: f32[64,128], index: 3, kind: output, shape index: {}]
  %s4 = sld [smem:[#allocation0]]
  $region26: #{generator_forward.1} parent=0
    _
  %s6 = ssub.s32 1, %s4
  %s7 = scalar_select 0, %s6, %s4
  $region1: #{generator_forward.1} parent=0
    #allocation2 [shape = 'u8[131072]{0}', space=vmem, size = 0x20000, scoped, tag = 'input window, operand 1, single buffered']
    #allocation3 [shape = 's32[1]{0}', space=sflag, size = 0x4, scoped, tag = 'scoped memory for generator_forward.1']
    #allocation4 [shape = 's32[1]{0}', space=sflag, size = 0x4, scoped, tag = 'scoped memory for generator_forward.1']
    #allocation5 [shape = 'u8[32768]{0}', space=vmem, size = 0x8000, scoped, tag = 'output window, operand 0, single buffered']
    %8 = vsyncpa [#allocation3], 0
    %9 = vsyncpa [#allocation4], 0
    // Predicated region
    $region2: #{generator_forward.1} parent=1 // pred_check
      _
    $region3: #{generator_forward.1} parent=1 // pred_check_branch
      %11 = sbr.rel (0) target = $region5
    $region4: #{generator_forward.1} parent=1 // pred_region
      _
    $region5: #{generator_forward.1} parent=1 // pred_fallthru
      _
    // Predicated region
    $region6: #{generator_forward.1} parent=1 // pred_check
      _
    $region7: #{generator_forward.1} parent=1 // pred_check_branch
      %13 = sbr.rel (0) target = $region9
    $region8: #{generator_forward.1} parent=1 // pred_region
      %15 = vsyncadd [#allocation3], 0
      %s16 = sshll.u32 %s1, 4
      %s17 = int_to_ptr.hbm [resolvable:$true] %s16
      %s18 = sshll.u32 [#allocation2], 4
      %s19 = int_to_ptr.vmem [resolvable:$true] %s18
      %24 = dma.hbm_to_vmem [thread:$0]  %s17, 4096, %s19, [#allocation3], 64, 64, 4
    $region9: #{generator_forward.1} parent=1 // pred_fallthru
      _
    // Predicated region
    $region10: #{generator_forward.1} parent=1 // pred_check
      _
    $region11: #{generator_forward.1} parent=1 // pred_check_branch
      %26 = sbr.rel (0) target = $region13
    $region12: #{generator_forward.1} parent=1 // pred_region
      _
    $region13: #{generator_forward.1} parent=1 // pred_fallthru
      _
    // Predicated region
    $region14: #{generator_forward.1} parent=1 // pred_check
      _
    $region15: #{generator_forward.1} parent=1 // pred_check_branch
      %28 = sbr.rel (0) target = $region17
    $region16: #{generator_forward.1} parent=1 // pred_region
      %30 = dma.done [#allocation3], 4096
    $region17: #{generator_forward.1} parent=1 // pred_fallthru
      _
    %v31 = vld [vmem:[%s0] sm:$0xff]
    %v32 = vld [vmem:[%s0 + $0x8] sm:$0xff]
    %v33 = vld [vmem:[%s0 + $0x10] sm:$0xff]
    %v34 = vld [vmem:[%s0 + $0x18] sm:$0xff]
    %v35 = vld [vmem:[%s0 + $0x20] sm:$0xff]
    %v36 = vld [vmem:[%s0 + $0x28] sm:$0xff]
    %v37 = vld [vmem:[%s0 + $0x30] sm:$0xff]
    %v38 = vld [vmem:[%s0 + $0x38] sm:$0xff]
    %v39 = vld [vmem:[#allocation2] sm:$0xf]
    %v40 = vld [vmem:[#allocation2 + $0x4] sm:$0xf]
    %v41 = vld [vmem:[#allocation2 + $0x8] sm:$0xf]
    %v42 = vld [vmem:[#allocation2 + $0xc] sm:$0xf]
    %v43 = vld [vmem:[#allocation2 + $0x10] sm:$0xf]
    %v44 = vld [vmem:[#allocation2 + $0x14] sm:$0xf]
    %v45 = vld [vmem:[#allocation2 + $0x18] sm:$0xf]
    %v46 = vld [vmem:[#allocation2 + $0x1c] sm:$0xf]
    %v47 = vld [vmem:[#allocation2 + $0x20] sm:$0xf]
    %v48 = vld [vmem:[#allocation2 + $0x24] sm:$0xf]
    %v49 = vld [vmem:[#allocation2 + $0x28] sm:$0xf]
    %v50 = vld [vmem:[#allocation2 + $0x2c] sm:$0xf]
    %v51 = vld [vmem:[#allocation2 + $0x30] sm:$0xf]
    %v52 = vld [vmem:[#allocation2 + $0x34] sm:$0xf]
    %v53 = vld [vmem:[#allocation2 + $0x38] sm:$0xf]
    %v54 = vld [vmem:[#allocation2 + $0x3c] sm:$0xf]
    %v55 = vld [vmem:[%s2] sm:$0x1]
    %v56 = vpack.c.bf16 %v32, %v31
    %v57 = vpack.c.bf16 %v34, %v33
    %v58 = vpack.c.bf16 %v36, %v35
    %v59 = vpack.c.bf16 %v38, %v37
    %v60 = vperm.slane %v55, 0
    %v77 = vunpack.c.l.b16 %v39
    %v78 = vunpack.c.l.b16 %v40
    %v79 = vunpack.c.l.b16 %v41
    %v80 = vunpack.c.l.b16 %v42
    %v81 = vunpack.c.l.b16 %v43
    %v82 = vunpack.c.l.b16 %v44
    %v83 = vunpack.c.l.b16 %v45
    %v84 = vunpack.c.l.b16 %v46
    %v85 = vunpack.c.l.b16 %v47
    %v86 = vunpack.c.l.b16 %v48
    %v87 = vunpack.c.l.b16 %v49
    %v88 = vunpack.c.l.b16 %v50
    %v89 = vunpack.c.l.b16 %v51
    %v90 = vunpack.c.l.b16 %v52
    %v91 = vunpack.c.l.b16 %v53
    %v92 = vunpack.c.l.b16 %v54
    %v93 = vpack.c.b16 %v78, %v77
    %v94 = vpack.c.b16 %v80, %v79
    %v95 = vpack.c.b16 %v82, %v81
    %v96 = vpack.c.b16 %v84, %v83
    %v97 = vpack.c.b16 %v86, %v85
    %v98 = vpack.c.b16 %v88, %v87
    %v99 = vpack.c.b16 %v90, %v89
    %v100 = vpack.c.b16 %v92, %v91
    %109 = vmatpush.bf16.msra.mxu0 %v100
    %110 = vmatpush.bf16.msra.mxu0 %v99
    %111 = vmatpush.bf16.msra.mxu0 %v98
    %112 = vmatpush.bf16.msra.mxu0 %v97
    %113 = vmatpush.bf16.msra.mxu0 %v96
    %114 = vmatpush.bf16.msra.mxu0 %v95
    %115 = vmatpush.bf16.msra.mxu0 %v94
    %116 = vmatpush.bf16.msra.mxu0 %v93
    %117 = vmatmul.bf16.gmra.mxu0 %v56
    %v118 = vpop.f32.mrf.mxu0
    %v119 = vadd.f32 %v60, %v118
    %v120 = vpop.f32.mrf.mxu0
    %v121 = vadd.f32 %v60, %v120
    %122 = vmatmul.bf16.gmra.mxu0 %v57
    %v123 = vpop.f32.mrf.mxu0
    %v124 = vadd.f32 %v60, %v123
    %v125 = vpop.f32.mrf.mxu0
    %v126 = vadd.f32 %v60, %v125
    %127 = vmatmul.bf16.gmra.mxu0 %v58
    %v128 = vpop.f32.mrf.mxu0
    %v129 = vadd.f32 %v60, %v128
    %v130 = vpop.f32.mrf.mxu0
    %v131 = vadd.f32 %v60, %v130
    %132 = vmatmul.bf16.gmra.mxu0 %v59
    %v133 = vpop.f32.mrf.mxu0
    %v134 = vadd.f32 %v60, %v133
    %v135 = vpop.f32.mrf.mxu0
    %v136 = vadd.f32 %v60, %v135
    %137 = vdwg.mxu0
    %v138 = vld [vmem:[%s2 + $0x4] sm:$0x1]
    %v139 = vld [vmem:[%s2 + $0x7] sm:$0x1]
    %v140 = vadd.f32 %v119, %v121
    %v141 = vadd.f32 %v140, %v124
    %v142 = vadd.f32 %v141, %v126
    %v143 = vadd.f32 %v142, %v129
    %v144 = vadd.f32 %v143, %v131
    %v145 = vadd.f32 %v144, %v134
    %v146 = vadd.f32 %v145, %v136
    %v147 = vrot.slane %v146, 4
    %v148 = vadd.f32 %v146, %v147
    %v149 = vrot.slane %v148, 2
    %v150 = vadd.f32 %v148, %v149
    %v151 = vrot.slane %v150, 1
    %v152 = vadd.f32 %v150, %v151
    %v153 = vmul.f32 %v119, %v119
    %v154 = vmul.f32 %v121, %v121
    %v155 = vmul.f32 %v124, %v124
    %v156 = vmul.f32 %v126, %v126
    %v157 = vmul.f32 %v129, %v129
    %v158 = vmul.f32 %v131, %v131
    %v159 = vmul.f32 %v134, %v134
    %v160 = vmul.f32 %v136, %v136
    %v161 = vadd.f32 %v153, %v154
    %v162 = vadd.f32 %v161, %v155
    %v163 = vadd.f32 %v162, %v156
    %v164 = vadd.f32 %v163, %v157
    %v165 = vadd.f32 %v164, %v158
    %v166 = vadd.f32 %v165, %v159
    %v167 = vadd.f32 %v166, %v160
    %v168 = vrot.slane %v167, 4
    %v169 = vadd.f32 %v167, %v168
    %v170 = vrot.slane %v169, 2
    %v171 = vadd.f32 %v169, %v170
    %v172 = vrot.slane %v171, 1
    %v173 = vadd.f32 %v171, %v172
    %v174 = vmul.f32 %v152, 0.015625
    %v175 = vmul.f32 %v173, 0.015625
    %v176 = vmul.f32 %v174, %v174
    %v177 = vsub.f32 %v175, %v176
    %v178 = vmax.f32 %v177, 0.0
    %v179 = vadd.f32 %v178, 1e-05
    %v180 = vrsqrt.pop %v179
    %v181 = vmul.f32 %v180, %v179
    %v182 = vmul.f32 %v181, %v180
    %v183 = vmul.f32 0.5, %v182
    %v184 = vsub.f32 1.5, %v183
    %v185 = vmul.f32 %v180, %v184
    %vm186 = vweird.f32 %v179
    %vm187 = vweird.f32 %v180
    %vm188 = vmor %vm186, %vm187
    %v189 = vsel %vm188, %v180, %v185
    %v190 = vmul.f32 %v189, %v138
    %v191 = vmul.f32 %v174, %v190
    %v192 = vsub.f32 %v139, %v191
    %v193 = vperm.slane %v190, 0
    %v194 = vmul.f32 %v119, %v193
    %v195 = vmul.f32 %v121, %v193
    %v196 = vmul.f32 %v124, %v193
    %v197 = vmul.f32 %v126, %v193
    %v198 = vmul.f32 %v129, %v193
    %v199 = vmul.f32 %v131, %v193
    %v200 = vmul.f32 %v134, %v193
    %v201 = vmul.f32 %v136, %v193
    %v202 = vperm.slane %v192, 0
    %v203 = vadd.f32 %v194, %v202
    %v204 = vadd.f32 %v195, %v202
    %v205 = vadd.f32 %v196, %v202
    %v206 = vadd.f32 %v197, %v202
    %v207 = vadd.f32 %v198, %v202
    %v208 = vadd.f32 %v199, %v202
    %v209 = vadd.f32 %v200, %v202
    %v210 = vadd.f32 %v201, %v202
    %v211 = vmax.f32 %v203, 0.0
    %v212 = vmax.f32 %v204, 0.0
    %v213 = vmax.f32 %v205, 0.0
    %v214 = vmax.f32 %v206, 0.0
    %v215 = vmax.f32 %v207, 0.0
    %v216 = vmax.f32 %v208, 0.0
    %v217 = vmax.f32 %v209, 0.0
    %v218 = vmax.f32 %v210, 0.0
    %s219 = scalar_lea.vmem [#allocation2], 64
    %v220 = vld [vmem:[%s219] sm:$0xf]
    %v221 = vld [vmem:[%s219 + $0x4] sm:$0xf]
    %v222 = vld [vmem:[%s219 + $0x8] sm:$0xf]
    %v223 = vld [vmem:[%s219 + $0xc] sm:$0xf]
    %v224 = vld [vmem:[%s219 + $0x10] sm:$0xf]
    %v225 = vld [vmem:[%s219 + $0x14] sm:$0xf]
    %v226 = vld [vmem:[%s219 + $0x18] sm:$0xf]
    %v227 = vld [vmem:[%s219 + $0x1c] sm:$0xf]
    %v228 = vld [vmem:[%s219 + $0x20] sm:$0xf]
    %v229 = vld [vmem:[%s219 + $0x24] sm:$0xf]
    %v230 = vld [vmem:[%s219 + $0x28] sm:$0xf]
    %v231 = vld [vmem:[%s219 + $0x2c] sm:$0xf]
    %v232 = vld [vmem:[%s219 + $0x30] sm:$0xf]
    %v233 = vld [vmem:[%s219 + $0x34] sm:$0xf]
    %v234 = vld [vmem:[%s219 + $0x38] sm:$0xf]
    %v235 = vld [vmem:[%s219 + $0x3c] sm:$0xf]
    %v236 = vld [vmem:[%s2 + $0x1] sm:$0x1]
    %v237 = vpack.c.bf16 %v212, %v211
    %v238 = vpack.c.bf16 %v214, %v213
    %v239 = vpack.c.bf16 %v216, %v215
    %v240 = vpack.c.bf16 %v218, %v217
    %v241 = vperm.slane %v236, 0
    %v258 = vunpack.c.l.b16 %v220
    %v259 = vunpack.c.l.b16 %v221
    %v260 = vunpack.c.l.b16 %v222
    %v261 = vunpack.c.l.b16 %v223
    %v262 = vunpack.c.l.b16 %v224
    %v263 = vunpack.c.l.b16 %v225
    %v264 = vunpack.c.l.b16 %v226
    %v265 = vunpack.c.l.b16 %v227
    %v266 = vunpack.c.l.b16 %v228
    %v267 = vunpack.c.l.b16 %v229
    %v268 = vunpack.c.l.b16 %v230
    %v269 = vunpack.c.l.b16 %v231
    %v270 = vunpack.c.l.b16 %v232
    %v271 = vunpack.c.l.b16 %v233
    %v272 = vunpack.c.l.b16 %v234
    %v273 = vunpack.c.l.b16 %v235
    %v274 = vpack.c.b16 %v259, %v258
    %v275 = vpack.c.b16 %v261, %v260
    %v276 = vpack.c.b16 %v263, %v262
    %v277 = vpack.c.b16 %v265, %v264
    %v278 = vpack.c.b16 %v267, %v266
    %v279 = vpack.c.b16 %v269, %v268
    %v280 = vpack.c.b16 %v271, %v270
    %v281 = vpack.c.b16 %v273, %v272
    %290 = vmatpush.bf16.msra.mxu0 %v281
    %291 = vmatpush.bf16.msra.mxu0 %v280
    %292 = vmatpush.bf16.msra.mxu0 %v279
    %293 = vmatpush.bf16.msra.mxu0 %v278
    %294 = vmatpush.bf16.msra.mxu0 %v277
    %295 = vmatpush.bf16.msra.mxu0 %v276
    %296 = vmatpush.bf16.msra.mxu0 %v275
    %297 = vmatpush.bf16.msra.mxu0 %v274
    %298 = vmatmul.bf16.gmra.mxu0 %v237
    %v299 = vpop.f32.mrf.mxu0
    %v300 = vadd.f32 %v241, %v299
    %v301 = vpop.f32.mrf.mxu0
    %v302 = vadd.f32 %v241, %v301
    %303 = vmatmul.bf16.gmra.mxu0 %v238
    %v304 = vpop.f32.mrf.mxu0
    %v305 = vadd.f32 %v241, %v304
    %v306 = vpop.f32.mrf.mxu0
    %v307 = vadd.f32 %v241, %v306
    %308 = vmatmul.bf16.gmra.mxu0 %v239
    %v309 = vpop.f32.mrf.mxu0
    %v310 = vadd.f32 %v241, %v309
    %v311 = vpop.f32.mrf.mxu0
    %v312 = vadd.f32 %v241, %v311
    %313 = vmatmul.bf16.gmra.mxu0 %v240
    %v314 = vpop.f32.mrf.mxu0
    %v315 = vadd.f32 %v241, %v314
    %v316 = vpop.f32.mrf.mxu0
    %v317 = vadd.f32 %v241, %v316
    %318 = vdwg.mxu0
    %v319 = vld [vmem:[%s2 + $0x5] sm:$0x1]
    %v320 = vld [vmem:[%s2 + $0x8] sm:$0x1]
    %v321 = vadd.f32 %v300, %v302
    %v322 = vadd.f32 %v321, %v305
    %v323 = vadd.f32 %v322, %v307
    %v324 = vadd.f32 %v323, %v310
    %v325 = vadd.f32 %v324, %v312
    %v326 = vadd.f32 %v325, %v315
    %v327 = vadd.f32 %v326, %v317
    %v328 = vrot.slane %v327, 4
    %v329 = vadd.f32 %v327, %v328
    %v330 = vrot.slane %v329, 2
    %v331 = vadd.f32 %v329, %v330
    %v332 = vrot.slane %v331, 1
    %v333 = vadd.f32 %v331, %v332
    %v334 = vmul.f32 %v300, %v300
    %v335 = vmul.f32 %v302, %v302
    %v336 = vmul.f32 %v305, %v305
    %v337 = vmul.f32 %v307, %v307
    %v338 = vmul.f32 %v310, %v310
    %v339 = vmul.f32 %v312, %v312
    %v340 = vmul.f32 %v315, %v315
    %v341 = vmul.f32 %v317, %v317
    %v342 = vadd.f32 %v334, %v335
    %v343 = vadd.f32 %v342, %v336
    %v344 = vadd.f32 %v343, %v337
    %v345 = vadd.f32 %v344, %v338
    %v346 = vadd.f32 %v345, %v339
    %v347 = vadd.f32 %v346, %v340
    %v348 = vadd.f32 %v347, %v341
    %v349 = vrot.slane %v348, 4
    %v350 = vadd.f32 %v348, %v349
    %v351 = vrot.slane %v350, 2
    %v352 = vadd.f32 %v350, %v351
    %v353 = vrot.slane %v352, 1
    %v354 = vadd.f32 %v352, %v353
    %v355 = vmul.f32 %v333, 0.015625
    %v356 = vmul.f32 %v354, 0.015625
    %v357 = vmul.f32 %v355, %v355
    %v358 = vsub.f32 %v356, %v357
    %v359 = vmax.f32 %v358, 0.0
    %v360 = vadd.f32 %v359, 1e-05
    %v361 = vrsqrt.pop %v360
    %v362 = vmul.f32 %v361, %v360
    %v363 = vmul.f32 %v362, %v361
    %v364 = vmul.f32 0.5, %v363
    %v365 = vsub.f32 1.5, %v364
    %v366 = vmul.f32 %v361, %v365
    %vm367 = vweird.f32 %v360
    %vm368 = vweird.f32 %v361
    %vm369 = vmor %vm367, %vm368
    %v370 = vsel %vm369, %v361, %v366
    %v371 = vmul.f32 %v370, %v319
    %v372 = vmul.f32 %v355, %v371
    %v373 = vsub.f32 %v320, %v372
    %v374 = vperm.slane %v371, 0
    %v375 = vmul.f32 %v300, %v374
    %v376 = vmul.f32 %v302, %v374
    %v377 = vmul.f32 %v305, %v374
    %v378 = vmul.f32 %v307, %v374
    %v379 = vmul.f32 %v310, %v374
    %v380 = vmul.f32 %v312, %v374
    %v381 = vmul.f32 %v315, %v374
    %v382 = vmul.f32 %v317, %v374
    %v383 = vperm.slane %v373, 0
    %v384 = vadd.f32 %v375, %v383
    %v385 = vadd.f32 %v376, %v383
    %v386 = vadd.f32 %v377, %v383
    %v387 = vadd.f32 %v378, %v383
    %v388 = vadd.f32 %v379, %v383
    %v389 = vadd.f32 %v380, %v383
    %v390 = vadd.f32 %v381, %v383
    %v391 = vadd.f32 %v382, %v383
    %v392 = vmax.f32 %v384, 0.0
    %v393 = vmax.f32 %v385, 0.0
    %v394 = vmax.f32 %v386, 0.0
    %v395 = vmax.f32 %v387, 0.0
    %v396 = vmax.f32 %v388, 0.0
    %v397 = vmax.f32 %v389, 0.0
    %v398 = vmax.f32 %v390, 0.0
    %v399 = vmax.f32 %v391, 0.0
    %s400 = scalar_lea.vmem [#allocation2], 128
    %v401 = vld [vmem:[%s400] sm:$0xf]
    %v402 = vld [vmem:[%s400 + $0x4] sm:$0xf]
    %v403 = vld [vmem:[%s400 + $0x8] sm:$0xf]
    %v404 = vld [vmem:[%s400 + $0xc] sm:$0xf]
    %v405 = vld [vmem:[%s400 + $0x10] sm:$0xf]
    %v406 = vld [vmem:[%s400 + $0x14] sm:$0xf]
    %v407 = vld [vmem:[%s400 + $0x18] sm:$0xf]
    %v408 = vld [vmem:[%s400 + $0x1c] sm:$0xf]
    %v409 = vld [vmem:[%s400 + $0x20] sm:$0xf]
    %v410 = vld [vmem:[%s400 + $0x24] sm:$0xf]
    %v411 = vld [vmem:[%s400 + $0x28] sm:$0xf]
    %v412 = vld [vmem:[%s400 + $0x2c] sm:$0xf]
    %v413 = vld [vmem:[%s400 + $0x30] sm:$0xf]
    %v414 = vld [vmem:[%s400 + $0x34] sm:$0xf]
    %v415 = vld [vmem:[%s400 + $0x38] sm:$0xf]
    %v416 = vld [vmem:[%s400 + $0x3c] sm:$0xf]
    %v417 = vld [vmem:[%s2 + $0x2] sm:$0x1]
    %v418 = vpack.c.bf16 %v393, %v392
    %v419 = vpack.c.bf16 %v395, %v394
    %v420 = vpack.c.bf16 %v397, %v396
    %v421 = vpack.c.bf16 %v399, %v398
    %v422 = vperm.slane %v417, 0
    %v439 = vunpack.c.l.b16 %v401
    %v440 = vunpack.c.l.b16 %v402
    %v441 = vunpack.c.l.b16 %v403
    %v442 = vunpack.c.l.b16 %v404
    %v443 = vunpack.c.l.b16 %v405
    %v444 = vunpack.c.l.b16 %v406
    %v445 = vunpack.c.l.b16 %v407
    %v446 = vunpack.c.l.b16 %v408
    %v447 = vunpack.c.l.b16 %v409
    %v448 = vunpack.c.l.b16 %v410
    %v449 = vunpack.c.l.b16 %v411
    %v450 = vunpack.c.l.b16 %v412
    %v451 = vunpack.c.l.b16 %v413
    %v452 = vunpack.c.l.b16 %v414
    %v453 = vunpack.c.l.b16 %v415
    %v454 = vunpack.c.l.b16 %v416
    %v455 = vpack.c.b16 %v440, %v439
    %v456 = vpack.c.b16 %v442, %v441
    %v457 = vpack.c.b16 %v444, %v443
    %v458 = vpack.c.b16 %v446, %v445
    %v459 = vpack.c.b16 %v448, %v447
    %v460 = vpack.c.b16 %v450, %v449
    %v461 = vpack.c.b16 %v452, %v451
    %v462 = vpack.c.b16 %v454, %v453
    %471 = vmatpush.bf16.msra.mxu0 %v462
    %472 = vmatpush.bf16.msra.mxu0 %v461
    %473 = vmatpush.bf16.msra.mxu0 %v460
    %474 = vmatpush.bf16.msra.mxu0 %v459
    %475 = vmatpush.bf16.msra.mxu0 %v458
    %476 = vmatpush.bf16.msra.mxu0 %v457
    %477 = vmatpush.bf16.msra.mxu0 %v456
    %478 = vmatpush.bf16.msra.mxu0 %v455
    %479 = vmatmul.bf16.gmra.mxu0 %v418
    %v480 = vpop.f32.mrf.mxu0
    %v481 = vadd.f32 %v422, %v480
    %v482 = vpop.f32.mrf.mxu0
    %v483 = vadd.f32 %v422, %v482
    %484 = vmatmul.bf16.gmra.mxu0 %v419
    %v485 = vpop.f32.mrf.mxu0
    %v486 = vadd.f32 %v422, %v485
    %v487 = vpop.f32.mrf.mxu0
    %v488 = vadd.f32 %v422, %v487
    %489 = vmatmul.bf16.gmra.mxu0 %v420
    %v490 = vpop.f32.mrf.mxu0
    %v491 = vadd.f32 %v422, %v490
    %v492 = vpop.f32.mrf.mxu0
    %v493 = vadd.f32 %v422, %v492
    %494 = vmatmul.bf16.gmra.mxu0 %v421
    %v495 = vpop.f32.mrf.mxu0
    %v496 = vadd.f32 %v422, %v495
    %v497 = vpop.f32.mrf.mxu0
    %v498 = vadd.f32 %v422, %v497
    %499 = vdwg.mxu0
    %v500 = vld [vmem:[%s2 + $0x6] sm:$0x1]
    %v501 = vld [vmem:[%s2 + $0x9] sm:$0x1]
    %v502 = vadd.f32 %v481, %v483
    %v503 = vadd.f32 %v502, %v486
    %v504 = vadd.f32 %v503, %v488
    %v505 = vadd.f32 %v504, %v491
    %v506 = vadd.f32 %v505, %v493
    %v507 = vadd.f32 %v506, %v496
    %v508 = vadd.f32 %v507, %v498
    %v509 = vrot.slane %v508, 4
    %v510 = vadd.f32 %v508, %v509
    %v511 = vrot.slane %v510, 2
    %v512 = vadd.f32 %v510, %v511
    %v513 = vrot.slane %v512, 1
    %v514 = vadd.f32 %v512, %v513
    %v515 = vmul.f32 %v481, %v481
    %v516 = vmul.f32 %v483, %v483
    %v517 = vmul.f32 %v486, %v486
    %v518 = vmul.f32 %v488, %v488
    %v519 = vmul.f32 %v491, %v491
    %v520 = vmul.f32 %v493, %v493
    %v521 = vmul.f32 %v496, %v496
    %v522 = vmul.f32 %v498, %v498
    %v523 = vadd.f32 %v515, %v516
    %v524 = vadd.f32 %v523, %v517
    %v525 = vadd.f32 %v524, %v518
    %v526 = vadd.f32 %v525, %v519
    %v527 = vadd.f32 %v526, %v520
    %v528 = vadd.f32 %v527, %v521
    %v529 = vadd.f32 %v528, %v522
    %v530 = vrot.slane %v529, 4
    %v531 = vadd.f32 %v529, %v530
    %v532 = vrot.slane %v531, 2
    %v533 = vadd.f32 %v531, %v532
    %v534 = vrot.slane %v533, 1
    %v535 = vadd.f32 %v533, %v534
    %v536 = vmul.f32 %v514, 0.015625
    %v537 = vmul.f32 %v535, 0.015625
    %v538 = vmul.f32 %v536, %v536
    %v539 = vsub.f32 %v537, %v538
    %v540 = vmax.f32 %v539, 0.0
    %v541 = vadd.f32 %v540, 1e-05
    %v542 = vrsqrt.pop %v541
    %v543 = vmul.f32 %v542, %v541
    %v544 = vmul.f32 %v543, %v542
    %v545 = vmul.f32 0.5, %v544
    %v546 = vsub.f32 1.5, %v545
    %v547 = vmul.f32 %v542, %v546
    %vm548 = vweird.f32 %v541
    %vm549 = vweird.f32 %v542
    %vm550 = vmor %vm548, %vm549
    %v551 = vsel %vm550, %v542, %v547
    %v552 = vmul.f32 %v551, %v500
    %v553 = vmul.f32 %v536, %v552
    %v554 = vsub.f32 %v501, %v553
    %v555 = vperm.slane %v552, 0
    %v556 = vmul.f32 %v481, %v555
    %v557 = vmul.f32 %v483, %v555
    %v558 = vmul.f32 %v486, %v555
    %v559 = vmul.f32 %v488, %v555
    %v560 = vmul.f32 %v491, %v555
    %v561 = vmul.f32 %v493, %v555
    %v562 = vmul.f32 %v496, %v555
    %v563 = vmul.f32 %v498, %v555
    %v564 = vperm.slane %v554, 0
    %v565 = vadd.f32 %v556, %v564
    %v566 = vadd.f32 %v557, %v564
    %v567 = vadd.f32 %v558, %v564
    %v568 = vadd.f32 %v559, %v564
    %v569 = vadd.f32 %v560, %v564
    %v570 = vadd.f32 %v561, %v564
    %v571 = vadd.f32 %v562, %v564
    %v572 = vadd.f32 %v563, %v564
    %v573 = vmax.f32 %v565, 0.0
    %v574 = vmax.f32 %v566, 0.0
    %v575 = vmax.f32 %v567, 0.0
    %v576 = vmax.f32 %v568, 0.0
    %v577 = vmax.f32 %v569, 0.0
    %v578 = vmax.f32 %v570, 0.0
    %v579 = vmax.f32 %v571, 0.0
    %v580 = vmax.f32 %v572, 0.0
    %s581 = scalar_lea.vmem [#allocation2], 192
    %v582 = vld [vmem:[%s581] sm:$0xf]
    %v583 = vld [vmem:[%s581 + $0x4] sm:$0xf]
    %v584 = vld [vmem:[%s581 + $0x8] sm:$0xf]
    %v585 = vld [vmem:[%s581 + $0xc] sm:$0xf]
    %v586 = vld [vmem:[%s581 + $0x10] sm:$0xf]
    %v587 = vld [vmem:[%s581 + $0x14] sm:$0xf]
    %v588 = vld [vmem:[%s581 + $0x18] sm:$0xf]
    %v589 = vld [vmem:[%s581 + $0x1c] sm:$0xf]
    %v590 = vld [vmem:[%s581 + $0x20] sm:$0xf]
    %v591 = vld [vmem:[%s581 + $0x24] sm:$0xf]
    %v592 = vld [vmem:[%s581 + $0x28] sm:$0xf]
    %v593 = vld [vmem:[%s581 + $0x2c] sm:$0xf]
    %v594 = vld [vmem:[%s581 + $0x30] sm:$0xf]
    %v595 = vld [vmem:[%s581 + $0x34] sm:$0xf]
    %v596 = vld [vmem:[%s581 + $0x38] sm:$0xf]
    %v597 = vld [vmem:[%s581 + $0x3c] sm:$0xf]
    %v598 = vld [vmem:[%s2 + $0x3] sm:$0x1]
    %v599 = vpack.c.bf16 %v574, %v573
    %v600 = vpack.c.bf16 %v576, %v575
    %v601 = vpack.c.bf16 %v578, %v577
    %v602 = vpack.c.bf16 %v580, %v579
    %v603 = vperm.slane %v598, 0
    %v620 = vunpack.c.l.b16 %v582
    %v621 = vunpack.c.l.b16 %v583
    %v622 = vunpack.c.l.b16 %v584
    %v623 = vunpack.c.l.b16 %v585
    %v624 = vunpack.c.l.b16 %v586
    %v625 = vunpack.c.l.b16 %v587
    %v626 = vunpack.c.l.b16 %v588
    %v627 = vunpack.c.l.b16 %v589
    %v628 = vunpack.c.l.b16 %v590
    %v629 = vunpack.c.l.b16 %v591
    %v630 = vunpack.c.l.b16 %v592
    %v631 = vunpack.c.l.b16 %v593
    %v632 = vunpack.c.l.b16 %v594
    %v633 = vunpack.c.l.b16 %v595
    %v634 = vunpack.c.l.b16 %v596
    %v635 = vunpack.c.l.b16 %v597
    %v636 = vpack.c.b16 %v621, %v620
    %v637 = vpack.c.b16 %v623, %v622
    %v638 = vpack.c.b16 %v625, %v624
    %v639 = vpack.c.b16 %v627, %v626
    %v640 = vpack.c.b16 %v629, %v628
    %v641 = vpack.c.b16 %v631, %v630
    %v642 = vpack.c.b16 %v633, %v632
    %v643 = vpack.c.b16 %v635, %v634
    %652 = vmatpush.bf16.msra.mxu0 %v643
    %653 = vmatpush.bf16.msra.mxu0 %v642
    %654 = vmatpush.bf16.msra.mxu0 %v641
    %655 = vmatpush.bf16.msra.mxu0 %v640
    %656 = vmatpush.bf16.msra.mxu0 %v639
    %657 = vmatpush.bf16.msra.mxu0 %v638
    %658 = vmatpush.bf16.msra.mxu0 %v637
    %659 = vmatpush.bf16.msra.mxu0 %v636
    %660 = vmatmul.bf16.gmra.mxu0 %v599
    %v661 = vpop.f32.mrf.mxu0
    %v662 = vadd.f32 %v603, %v661
    %v663 = vpop.f32.mrf.mxu0
    %v664 = vadd.f32 %v603, %v663
    %665 = vmatmul.bf16.gmra.mxu0 %v600
    %v666 = vpop.f32.mrf.mxu0
    %v667 = vadd.f32 %v603, %v666
    %v668 = vpop.f32.mrf.mxu0
    %v669 = vadd.f32 %v603, %v668
    %670 = vmatmul.bf16.gmra.mxu0 %v601
    %v671 = vpop.f32.mrf.mxu0
    %v672 = vadd.f32 %v603, %v671
    %v673 = vpop.f32.mrf.mxu0
    %v674 = vadd.f32 %v603, %v673
    %675 = vmatmul.bf16.gmra.mxu0 %v602
    %v676 = vpop.f32.mrf.mxu0
    %v677 = vadd.f32 %v603, %v676
    %v678 = vpop.f32.mrf.mxu0
    %v679 = vadd.f32 %v603, %v678
    %680 = vdwg.mxu0
    %681 = vst [vmem:[#allocation5] sm:$0xff] %v662
    %682 = vst [vmem:[#allocation5 + $0x8] sm:$0xff] %v664
    %683 = vst [vmem:[#allocation5 + $0x10] sm:$0xff] %v667
    %684 = vst [vmem:[#allocation5 + $0x18] sm:$0xff] %v669
    %685 = vst [vmem:[#allocation5 + $0x20] sm:$0xff] %v672
    %686 = vst [vmem:[#allocation5 + $0x28] sm:$0xff] %v674
    %687 = vst [vmem:[#allocation5 + $0x30] sm:$0xff] %v677
    %688 = vst [vmem:[#allocation5 + $0x38] sm:$0xff] %v679
    // Predicated region
    $region18: #{generator_forward.1} parent=1 // pred_check
      _
    $region19: #{generator_forward.1} parent=1 // pred_check_branch
      %690 = sbr.rel (0) target = $region21
    $region20: #{generator_forward.1} parent=1 // pred_region
      %692 = vsyncadd [#allocation4], 0
      %s693 = sshll.u32 [#allocation5], 4
      %s694 = int_to_ptr.vmem [resolvable:$true] %s693
      %s695 = sshll.u32 %s3, 4
      %s696 = int_to_ptr.hbm [resolvable:$true] %s695
      %701 = dma.vmem_to_hbm [thread:$0]  %s694, 1024, %s696, [#allocation4], 128, 128, 8
    $region21: #{generator_forward.1} parent=1 // pred_fallthru
      _
    // Predicated region
    $region22: #{generator_forward.1} parent=1 // pred_check
      _
    $region23: #{generator_forward.1} parent=1 // pred_check_branch
      %703 = sbr.rel (0) target = $region25
    $region24: #{generator_forward.1} parent=1 // pred_region
      %705 = dma.done [#allocation4], 1024
    $region25: #{generator_forward.1} parent=1 // pred_fallthru
      _
    %706 = vsyncpa [#allocation3], 1
    %707 = vsyncpa [#allocation4], 1

</llo_original>
